<compile_context>
chip_gen: v7x
topology: tpu7x:2x2x1
jax: 0.10.0
libtpu: 0.0.40
codegen_flags: <defaults>
</compile_context>

<pallas_src>
import jax
import jax.numpy as jnp
from jax.experimental import pallas as pl
from jax.experimental.pallas import tpu as pltpu

EPS = 1e-5


# ---------------------------------------------------------------------------
# Kernel: lane-dense deconv matmul (R, CK9) @ (CK9, TM) -> (R, TM) bf16,
#         with BN partial stats (sum, sum of squares) accumulated in the
#         VMEM-resident stat blocks across the inner ("arbitrary") grid axis.
#   R   = 4 * Cout   (stride-2 phase (ph, pw) x output channel)
#   CK9 = 9 * Cin    (the 9 shared shifted taps of the padded input)
# ---------------------------------------------------------------------------
def conv_stats_kernel(p_ref, w_ref, conv_ref, psum_ref, psq_ref):
    pi = pl.program_id(1)  # inner (reduction / M-tile) axis

    acc = jnp.dot(w_ref[...], p_ref[...],
                  preferred_element_type=jnp.float32)          # (R, TM) f32
    conv_ref[...] = acc.astype(conv_ref.dtype)                 # bf16 writeback

    @pl.when(pi == 0)
    def _():
        psum_ref[...] = jnp.zeros_like(psum_ref)
        psq_ref[...] = jnp.zeros_like(psq_ref)

    psum_ref[0] += jnp.sum(acc, axis=-1, keepdims=True)        # (R, 1) f32
    psq_ref[0] += jnp.sum(acc * acc, axis=-1, keepdims=True)   # (R, 1) f32


def _vmem_capacity_bytes():
    try:
        cap = getattr(pltpu.get_tpu_info(), "vmem_capacity_bytes", None)
        if cap:
            return int(cap)
    except Exception:
        pass
    return 64 * 1024 * 1024  # conservative default: v7x per-TensorCore VMEM


def _pick_tiles(M, ck9, rows):
    """Choose the M-tile and the (parallel, arbitrary) grid split from VMEM budget."""
    budget = min((_vmem_capacity_bytes() * 3) // 4, 96 * 1024 * 1024)
    per_lane = 2 * 2 * (ck9 + rows)                    # double-buffered bf16 in + out, per lane
    fixed = rows * ck9 * 2 + 8 * rows * 4 + (1 << 20)  # weight + stat blocks + slack
    divisors = [t for t in (4096, 2048, 1024, 512, 256, 128) if M % t == 0]
    fitting = [t for t in divisors if fixed + per_lane * t <= budget]
    if fitting:
        tm = next((t for t in fitting if M // t >= 2), fitting[0])  # keep >=2 steps if possible
    elif divisors:
        tm = divisors[-1]
    else:
        tm = M  # ragged / tiny M: one full-width tile (block == full dim is allowed)
    n_tiles = M // tm
    n_outer = 1
    for d in (2, 3, 4, 5, 6, 7, 8):  # smallest split >= 2 for megacore
        if n_tiles % d == 0:
            n_outer = d
            break
    return tm, n_outer, n_tiles // n_outer, int(budget)


@jax.jit
def deconv2d_bn_forward(x, w_t, bias, gamma, beta):
    """x: (N, Cin, H, W); w_t: (Cin, Cout, 4, 4) [PyTorch ConvTranspose2d layout].

    ConvTranspose2d(kernel=4, stride=2, padding=1, bias=True) + training-mode BatchNorm2d
    + ReLU.  `bias` is accepted but not applied in the hot path: a per-channel constant
    added before training-mode BN is exactly cancelled by the mean subtraction.
    """
    del bias
    N, C, H, W = x.shape
    Cin, O, K, _ = w_t.shape
    assert Cin == C and K == 4
    M = N * H * W          # output positions per stride-2 phase (lane axis)
    M_total = 4 * M        # = N * (2H) * (2W)
    R = 4 * O              # (phase, out-channel) rows
    CK9 = 9 * C            # deduped taps

    # --- glue: 9 shared shifted taps of the pad-by-1 input; lane axis = (n, i, j) ---
    x_pad = jnp.pad(x, ((0, 0), (0, 0), (1, 1), (1, 1)))
    taps = jnp.stack([x_pad[:, :, r:r + H, c:c + W]
                      for r in range(3) for c in range(3)], axis=2)      # (N, C, 9, H, W)
    patches = taps.transpose(1, 2, 0, 3, 4).reshape(CK9, M).astype(jnp.bfloat16)

    # --- glue: combined (4*Cout, 9*Cin) weight.  Output pixel (2i+ph, 2j+pw) uses padded
    #     taps (i+ph+dh, j+pw+dw) with kernel indices (3-ph-2dh, 3-pw-2dw), dh,dw in {0,1}. ---
    w_comb = jnp.zeros((4, O, C, 3, 3), dtype=jnp.float32)
    for ph in range(2):
        for pw in range(2):
            for dh in range(2):
                for dw in range(2):
                    w_comb = w_comb.at[ph * 2 + pw, :, :, ph + dh, pw + dw].set(
                        w_t[:, :, 3 - ph - 2 * dh, 3 - pw - 2 * dw].T)
    w_comb = w_comb.reshape(R, CK9).astype(jnp.bfloat16)

    TM, n_outer, n_inner, budget = _pick_tiles(M, CK9, R)

    cost = pl.CostEstimate(
        flops=2 * R * CK9 * M,
        transcendentals=0,
        bytes_accessed=CK9 * M * 2 + R * CK9 * 2 + R * M * 2 + 2 * n_outer * R * 4)

    conv_flat, psum, psq = pl.pallas_call(
        conv_stats_kernel,
        out_shape=(jax.ShapeDtypeStruct((R, M), jnp.bfloat16),
                   jax.ShapeDtypeStruct((n_outer, R, 1), jnp.float32),
                   jax.ShapeDtypeStruct((n_outer, R, 1), jnp.float32)),
        grid_spec=pltpu.PrefetchScalarGridSpec(
            num_scalar_prefetch=0,
            grid=(n_outer, n_inner),
            in_specs=[pl.BlockSpec((CK9, TM), lambda po, pi: (0, po * n_inner + pi)),
                      pl.BlockSpec((R, CK9), lambda po, pi: (0, 0))],
            out_specs=(pl.BlockSpec((R, TM), lambda po, pi: (0, po * n_inner + pi)),
                       pl.BlockSpec((1, R, 1), lambda po, pi: (po, 0, 0)),
                       pl.BlockSpec((1, R, 1), lambda po, pi: (po, 0, 0)))),
        compiler_params=pltpu.CompilerParams(
            dimension_semantics=("parallel", "arbitrary"),
            vmem_limit_bytes=budget),
        cost_estimate=cost,
    )(patches, w_comb)

    # --- tiny O(Cout) finalize: fold stats + gamma/beta into scale/shift ---
    sums = psum.sum(axis=0)[:, 0].reshape(4, O).sum(axis=0)
    sqs = psq.sum(axis=0)[:, 0].reshape(4, O).sum(axis=0)
    mean = sums / M_total
    var = jnp.maximum(sqs / M_total - mean * mean, 0.0)   # biased variance, f32
    inv_std = jax.lax.rsqrt(var + EPS)
    scale = (gamma * inv_std).astype(jnp.float32)
    shift = (beta - mean * scale).astype(jnp.float32)

    # --- BN affine + ReLU, fused by XLA into the phase de-interleave transpose ---
    scale_r = jnp.tile(scale, 4).reshape(R, 1)
    shift_r = jnp.tile(shift, 4).reshape(R, 1)
    y_flat = jnp.maximum(conv_flat.astype(jnp.float32) * scale_r + shift_r, 0.0)
    y = y_flat.reshape(2, 2, O, N, H, W).transpose(3, 2, 4, 0, 5, 1)
    return y.reshape(N, O, 2 * H, 2 * W)


def reference_forward(x, w_t, bias, gamma, beta, stride=2, padding=1):
    """Pure-JAX reference (lax conv) for sanity checking the Pallas path."""
    Cin, O, K, _ = w_t.shape
    w_corr = jnp.flip(w_t, axis=(2, 3)).transpose(1, 0, 2, 3)  # (O, Cin, K, K)
    conv = jax.lax.conv_general_dilated(
        x, w_corr, window_strides=(1, 1),
        padding=[(K - 1 - padding, K - 1 - padding)] * 2,
        lhs_dilation=(stride, stride),
        dimension_numbers=("NCHW", "OIHW", "NCHW"))
    conv = conv + bias.reshape(1, O, 1, 1)
    mean = conv.mean(axis=(0, 2, 3), keepdims=True)
    var = ((conv - mean) ** 2).mean(axis=(0, 2, 3), keepdims=True)
    y = (conv - mean) * jax.lax.rsqrt(var + EPS)
    y = y * gamma.reshape(1, O, 1, 1) + beta.reshape(1, O, 1, 1)
    return jnp.maximum(y, 0.0)


if __name__ == "__main__":
    N, Cin, Cout, H, W, K = 2, 4, 8, 16, 16, 4

    key = jax.random.PRNGKey(0)
    kx, kw, kb, kg, kbeta = jax.random.split(key, 5)
    x = jax.random.normal(kx, (N, Cin, H, W), dtype=jnp.float32)
    # ConvTranspose2d weight layout: (in_channels, out_channels, kH, kW)
    w_t = 0.1 * jax.random.normal(kw, (Cin, Cout, K, K), dtype=jnp.float32)
    bias = 0.1 * jax.random.normal(kb, (Cout,), dtype=jnp.float32)
    gamma = 1.0 + 0.1 * jax.random.normal(kg, (Cout,), dtype=jnp.float32)
    beta = 0.1 * jax.random.normal(kbeta, (Cout,), dtype=jnp.float32)

    out = deconv2d_bn_forward(x, w_t, bias, gamma, beta)
    jax.block_until_ready(out)
    assert out.shape == (N, Cout, 2 * H, 2 * W), out.shape

    ref = reference_forward(x, w_t, bias, gamma, beta)
    # bf16 MXU operands + bf16 conv intermediate (f32 stats/accumulate) -> loose tolerance.
    assert jnp.allclose(out, ref, atol=5e-2, rtol=5e-2), float(
        jnp.max(jnp.abs(out - ref)))

    print("KERNEL_OK")
</pallas_src>

<mosaic_0001>
module attributes {stable_mosaic.version = 11 : i64} {
  func.func @conv_stats_kernel(%arg0: i32, %arg1: i32, %arg2: memref<36x256xbf16, #tpu.memory_space<vmem>>, %arg3: memref<32x36xbf16, #tpu.memory_space<vmem>>, %arg4: memref<32x256xbf16, #tpu.memory_space<vmem>>, %arg5: memref<1x32x1xf32, #tpu.memory_space<vmem>>, %arg6: memref<1x32x1xf32, #tpu.memory_space<vmem>>) attributes {dimension_semantics = [#tpu.dimension_semantics<parallel>, #tpu.dimension_semantics<arbitrary>], iteration_bounds = array<i64: 2, 1>, scalar_prefetch = 0 : i64, scratch_operands = 0 : i64, tpu.core_type = #tpu.core_type<tc>, window_params = [{transform_indices = @transform_0, window_bounds = array<i64: 36, 256>}, {pipeline_mode = #tpu.pipeline_mode<synchronous>, transform_indices = @transform_1, window_bounds = array<i64: 32, 36>}, {transform_indices = @transform_2, window_bounds = array<i64: 32, 256>}, {transform_indices = @transform_3, window_bounds = array<i64: 1, 32, 1>}, {transform_indices = @transform_4, window_bounds = array<i64: 1, 32, 1>}]} {
    %c0 = arith.constant 0 : index
    %c0_0 = arith.constant 0 : index
    %0 = vector.load %arg3[%c0, %c0_0] : memref<32x36xbf16, #tpu.memory_space<vmem>>, vector<32x36xbf16>
    %c0_1 = arith.constant 0 : index
    %c0_2 = arith.constant 0 : index
    %1 = vector.load %arg2[%c0_1, %c0_2] : memref<36x256xbf16, #tpu.memory_space<vmem>>, vector<36x256xbf16>
    %cst = arith.constant dense<0.000000e+00> : vector<32x256xf32>
    %2 = tpu.matmul %0, %1, %cst {dimension_numbers = #tpu.dot_dimension_numbers<[1], [0], [0], [1], [0, 0, 1, 1], [], []>} : vector<32x36xbf16>, vector<36x256xbf16>, vector<32x256xf32> -> vector<32x256xf32>
    %3 = arith.truncf %2 : vector<32x256xf32> to vector<32x256xbf16>
    %c0_3 = arith.constant 0 : index
    %c0_4 = arith.constant 0 : index
    %4 = vector.load %arg4[%c0_3, %c0_4] : memref<32x256xbf16, #tpu.memory_space<vmem>>, vector<32x256xbf16>
    tpu.vector_store %arg4[%c0_3, %c0_4], %3 {strides = array<i32>} : memref<32x256xbf16, #tpu.memory_space<vmem>>, vector<32x256xbf16>,
    %c0_i32 = arith.constant 0 : i32
    %5 = arith.cmpi eq, %arg1, %c0_i32 : i32
    %6 = arith.extui %5 : i1 to i32
    %c0_i32_5 = arith.constant 0 : i32
    %7 = arith.cmpi ne, %6, %c0_i32_5 : i32
    scf.if %7 {
      %cst_20 = arith.constant 0.000000e+00 : f32
      %25 = vector.broadcast %cst_20 : f32 to vector<1x32x1xf32>
      %c0_21 = arith.constant 0 : index
      %c0_22 = arith.constant 0 : index
      %c0_23 = arith.constant 0 : index
      %26 = vector.load %arg5[%c0_21, %c0_22, %c0_23] : memref<1x32x1xf32, #tpu.memory_space<vmem>>, vector<1x32x1xf32>
      tpu.vector_store %arg5[%c0_21, %c0_22, %c0_23], %25 {strides = array<i32>} : memref<1x32x1xf32, #tpu.memory_space<vmem>>, vector<1x32x1xf32>,
      %cst_24 = arith.constant 0.000000e+00 : f32
      %27 = vector.broadcast %cst_24 : f32 to vector<1x32x1xf32>
      %c0_25 = arith.constant 0 : index
      %c0_26 = arith.constant 0 : index
      %c0_27 = arith.constant 0 : index
      %28 = vector.load %arg6[%c0_25, %c0_26, %c0_27] : memref<1x32x1xf32, #tpu.memory_space<vmem>>, vector<1x32x1xf32>
      tpu.vector_store %arg6[%c0_25, %c0_26, %c0_27], %27 {strides = array<i32>} : memref<1x32x1xf32, #tpu.memory_space<vmem>>, vector<1x32x1xf32>,
    } else {
    }
    %c0_6 = arith.constant 0 : index
    %c0_7 = arith.constant 0 : index
    %c0_8 = arith.constant 0 : index
    %8 = vector.load %arg5[%c0_6, %c0_7, %c0_8] : memref<1x32x1xf32, #tpu.memory_space<vmem>>, vector<1x32x1xf32>
    %9 = vector.shape_cast %8 : vector<1x32x1xf32> to vector<32x1xf32>
    %cst_9 = arith.constant dense<0.000000e+00> : vector<32xf32>
    %10 = vector.multi_reduction <add>, %2, %cst_9 [1] : vector<32x256xf32> to vector<32xf32>
    %11 = vector.shape_cast %10 : vector<32xf32> to vector<32x1xf32>
    %12 = arith.addf %9, %11 : vector<32x1xf32>
    %c0_10 = arith.constant 0 : index
    %c0_11 = arith.constant 0 : index
    %c0_12 = arith.constant 0 : index
    %13 = vector.load %arg5[%c0_10, %c0_11, %c0_12] : memref<1x32x1xf32, #tpu.memory_space<vmem>>, vector<1x32x1xf32>
    %14 = vector.shape_cast %13 : vector<1x32x1xf32> to vector<32x1xf32>
    %15 = vector.shape_cast %12 : vector<32x1xf32> to vector<1x32x1xf32>
    tpu.vector_store %arg5[%c0_10, %c0_11, %c0_12], %15 {strides = array<i32>} : memref<1x32x1xf32, #tpu.memory_space<vmem>>, vector<1x32x1xf32>,
    %c0_13 = arith.constant 0 : index
    %c0_14 = arith.constant 0 : index
    %c0_15 = arith.constant 0 : index
    %16 = vector.load %arg6[%c0_13, %c0_14, %c0_15] : memref<1x32x1xf32, #tpu.memory_space<vmem>>, vector<1x32x1xf32>
    %17 = vector.shape_cast %16 : vector<1x32x1xf32> to vector<32x1xf32>
    %18 = arith.mulf %2, %2 : vector<32x256xf32>
    %cst_16 = arith.constant dense<0.000000e+00> : vector<32xf32>
    %19 = vector.multi_reduction <add>, %18, %cst_16 [1] : vector<32x256xf32> to vector<32xf32>
    %20 = vector.shape_cast %19 : vector<32xf32> to vector<32x1xf32>
    %21 = arith.addf %17, %20 : vector<32x1xf32>
    %c0_17 = arith.constant 0 : index
    %c0_18 = arith.constant 0 : index
    %c0_19 = arith.constant 0 : index
    %22 = vector.load %arg6[%c0_17, %c0_18, %c0_19] : memref<1x32x1xf32, #tpu.memory_space<vmem>>, vector<1x32x1xf32>
    %23 = vector.shape_cast %22 : vector<1x32x1xf32> to vector<32x1xf32>
    %24 = vector.shape_cast %21 : vector<32x1xf32> to vector<1x32x1xf32>
    tpu.vector_store %arg6[%c0_17, %c0_18, %c0_19], %24 {strides = array<i32>} : memref<1x32x1xf32, #tpu.memory_space<vmem>>, vector<1x32x1xf32>,
    return
  }
  func.func @transform_0(%arg0: i32, %arg1: i32) -> (i32, i32) {
    %c1_i32 = arith.constant 1 : i32
    %0 = arith.muli %arg0, %c1_i32 : i32
    %1 = arith.addi %0, %arg1 : i32
    %c0_i32 = arith.constant 0 : i32
    %c0_i32_0 = arith.constant 0 : i32
    return %c0_i32, %1 : i32, i32
  }
  func.func @transform_1(%arg0: i32, %arg1: i32) -> (i32, i32) {
    %c0_i32 = arith.constant 0 : i32
    %c0_i32_0 = arith.constant 0 : i32
    %c0_i32_1 = arith.constant 0 : i32
    return %c0_i32, %c0_i32_0 : i32, i32
  }
  func.func @transform_2(%arg0: i32, %arg1: i32) -> (i32, i32) {
    %c1_i32 = arith.constant 1 : i32
    %0 = arith.muli %arg0, %c1_i32 : i32
    %1 = arith.addi %0, %arg1 : i32
    %c0_i32 = arith.constant 0 : i32
    %c0_i32_0 = arith.constant 0 : i32
    return %c0_i32, %1 : i32, i32
  }
  func.func @transform_3(%arg0: i32, %arg1: i32) -> (i32, i32, i32) {
    %c0_i32 = arith.constant 0 : i32
    %c0_i32_0 = arith.constant 0 : i32
    %c0_i32_1 = arith.constant 0 : i32
    return %arg0, %c0_i32, %c0_i32_0 : i32, i32, i32
  }
  func.func @transform_4(%arg0: i32, %arg1: i32) -> (i32, i32, i32) {
    %c0_i32 = arith.constant 0 : i32
    %c0_i32_0 = arith.constant 0 : i32
    %c0_i32_1 = arith.constant 0 : i32
    return %arg0, %c0_i32, %c0_i32_0 : i32, i32, i32
  }
}

</mosaic_0001>

<llo_original>
// kernel: squeeze.34
$region0: #{squeeze.34}
  %s0 = inlined_call_operand.vmem [shape: f32[32], index: 0, kind: input, shape index: {}]
  %s1 = inlined_call_operand.vmem [shape: f32[4,8], index: 1, kind: output, shape index: {}]
  $region1: #{squeeze.34} parent=0
    #allocation0 [shape = 'u8[4096]{0}', space=vmem, size = 0x1000, scoped, tag = 'scoped mem for output reshape']
    #allocation1 [shape = 'u8[4096]{0}', space=vmem, size = 0x1000, scoped, tag = 'scoped mem for input reshape']
    %s3 = sshllo.u32 0, 1
    %v4 = vld [vmem:[%s0] sm:%s3]
    %5 = vst [vmem:[#allocation1] sm:%s3] %v4
    %v6 = vld [vmem:[#allocation1] sm:$0x1]
    %vm7 = vcmask 64512
    %8 = vst.msk [vmem:[#allocation0] sm:$0x1] %vm7, %v6
    %v9 = vld [vmem:[#allocation1] sm:$0x1]
    %10 = vrot.lane.b32.xlu0 %v9, 120
    %v11 = vpop.permute.xlu0 %10
    %vm12 = vcmask 64512
    %s13 = scalar_lea.vmem [#allocation0], 1
    %14 = vst.msk [vmem:[%s13] sm:$0x1] %vm12, %v11
    %v15 = vld [vmem:[#allocation1] sm:$0x1]
    %16 = vrot.lane.b32.xlu0 %v15, 112
    %v17 = vpop.permute.xlu0 %16
    %vm18 = vcmask 64512
    %s19 = scalar_lea.vmem [#allocation0], 2
    %20 = vst.msk [vmem:[%s19] sm:$0x1] %vm18, %v17
    %v21 = vld [vmem:[#allocation1] sm:$0x1]
    %22 = vrot.lane.b32.xlu0 %v21, 104
    %v23 = vpop.permute.xlu0 %22
    %vm24 = vcmask 64512
    %s25 = scalar_lea.vmem [#allocation0], 3
    %26 = vst.msk [vmem:[%s25] sm:$0x1] %vm24, %v23
    %s28 = sshllo.u32 0, 4
    %v30 = vld [vmem:[#allocation0] sm:%s28]
    %s31 = sshllo.u32 0, 4
    %32 = vst [vmem:[%s1] sm:%s31] %v30

// kernel: tile.18
$region0: #{tile.18}
  #allocation0 [shape = 's32[1]{0}', space=sflag, size = 0x4, scoped, tag = 'scoped memory for tile.18']
  %s0 = inlined_call_operand.vmem [shape: f32[8], index: 0, kind: input, shape index: {}]
  %s1 = inlined_call_operand.vmem [shape: f32[4,8], index: 1, kind: output, shape index: {}]
  // Predicated region
  $region2: #{tile.18} parent=0 // pred_check
    _
  $region3: #{tile.18} parent=0 // pred_check_branch
    %3 = sbr.rel (0) target = $region5
  $region4: #{tile.18} parent=0 // pred_region
    _
  $region5: #{tile.18} parent=0 // pred_fallthru
    _
  %v4 = vld [vmem:[%s0] ss:$0 sm:$0xff]
  %5 = vst [vmem:[%s1] sm:$0xf] %v4

// kernel: deconv2d_bn_forward.1
$region0: #{deconv2d_bn_forward.1}
  #allocation0 [shape = 'u32[]', space=smem, size = 0x4, offset = 0x4, fixed_abs, tag = 'smem constant byte address 0x4 - core index']
  #allocation1 [shape = 'u32[144,128]{1,0:T(1,128)}', space=vmem, size = 0x12000, scoped, tag = 'internal scratch']
  %s0 = inlined_call_operand.vmem [shape: bf16[36,512], index: 0, kind: input, shape index: {}]
  %s1 = inlined_call_operand.vmem [shape: bf16[32,36], index: 1, kind: input, shape index: {}]
  %s2 = inlined_call_operand.vmem [shape: bf16[32,512], index: 2, kind: output, shape index: {0}]
  %s3 = inlined_call_operand.vmem [shape: f32[2,32,1], index: 3, kind: output, shape index: {1}]
  %s4 = inlined_call_operand.vmem [shape: f32[2,32,1], index: 4, kind: output, shape index: {2}]
  %5 = xla_tuple %s2, %s3, %s4
  %s6 = sld [smem:[#allocation0]]
  $region133: #{deconv2d_bn_forward.1} parent=0
    _
  %s8 = ssub.s32 1, %s6
  %s9 = scalar_select 0, %s8, %s6
  $region1: #{deconv2d_bn_forward.1} parent=0
    #allocation2 [shape = 'u8[40960]{0}', space=vmem, size = 0xa000, scoped, tag = 'input window, operand 0']
    #allocation3 [shape = 'u8[32768]{0}', space=vmem, size = 0x8000, scoped, tag = 'output window, operand 0']
    loop: start=0, step=1, limit=4
    $region2: #{deconv2d_bn_forward.1} parent=1 // loop_pre_header
      _
    $region3: #{deconv2d_bn_forward.1} parent=1 // loop_header
      %s11 = sphi 0, %s15
      %p12 = scmp.ge.s32.totalorder %s11, 4
      %s18 = sphi 0, %s30
      %s19 = sphi 0, %s26
      %s20 = sphi 0, %s18
      %s21 = sphi 0, %s19
      %s22 = sphi 0, %s20
      %s23 = sphi 0, %s21
      %s35 = sphi 0, %s37
      %s38 = sphi 0, %s35
      %s39 = sphi 0, %s38
      %s55 = sphi 0, %s39
      %s59 = sphi 0, %s59
      %s61 = sphi 0, %s59
      %s62 = sphi 0, %s61
      %s76 = sphi 0, %s62
      %s84 = sphi 0, %s86
      %s87 = sphi 0, %s84
      %s88 = sphi 0, %s87
      %s104 = sphi 0, %s88
      %s110 = sphi 0, %s112
      %s113 = sphi 0, %s110
      %s114 = sphi 0, %s113
      %s130 = sphi 0, %s114
      %s136 = sphi 0, %s138
      %s139 = sphi 0, %s136
      %s140 = sphi 0, %s139
      %s156 = sphi 0, %s140
    $region4: #{deconv2d_bn_forward.1} parent=1 // loop_header_branch
      %14 = sbr.rel (%p12) target = $region8
    $region5: #{deconv2d_bn_forward.1} parent=1 // loop_body
      %s16 = ssub.s32 %s11, 1
      %s17 = ssub.s32 %s11, 2
      %s24 = sadd.s32 1, %s19
      %p25 = scmp.ge.s32.totalorder %s24, 1
      %s26 = scalar_select %p25, 0, %s24
      %s27 = sadd.s32 1, %s18
      %s28 = scalar_select %p25, %s27, %s18
      %p29 = scmp.ge.s32.totalorder %s28, 2
      %s30 = scalar_select %p29, 0, %s28
      %s31 = sadd.s32 %s18, %s19
      %s32 = sadd.s32 %s30, %s26
      %s33 = ssub.s32 %s31, %s32
      %p34 = scmp.eq.s32.totalorder %s33, 0
      %s36 = sadd.s32 %s35, 1
      %s37 = scalar_select %p34, %s35, %s36
      %p40 = pneg %p34
      %p41 = scmp.eq.s32.totalorder %s11, 1
      %p42 = por %p40, %p41
      %p43 = scmp.ne.s32.totalorder %s35, %s38
      %p44 = scmp.eq.s32.totalorder %s11, 0
      %p45 = por %p43, %p44
      %p46 = scmp.ne.s32.totalorder %s35, %s38
      %p47 = scmp.eq.s32.totalorder %s16, 1
      %p48 = por %p46, %p47
      %p49 = scmp.ne.s32.totalorder %s38, %s39
      %p50 = scmp.eq.s32.totalorder %s16, 0
      %p51 = por %p49, %p50
      %p52 = scmp.ne.s32.totalorder %s38, %s39
      %p53 = scmp.eq.s32.totalorder %s17, 1
      %p54 = por %p52, %p53
      %p56 = scmp.ne.s32.totalorder %s39, %s55
      %p57 = scmp.eq.s32.totalorder %s17, 0
      %p58 = por %p56, %p57
      %s60 = sadd.s32 %s59, 1
      %p63 = scmp.eq.s32.totalorder %s11, 1
      %p64 = scmp.ne.s32.totalorder %s59, %s61
      %p65 = scmp.eq.s32.totalorder %s11, 0
      %p66 = por %p64, %p65
      %p67 = scmp.ne.s32.totalorder %s59, %s61
      %p68 = scmp.eq.s32.totalorder %s16, 1
      %p69 = por %p67, %p68
      %p70 = scmp.ne.s32.totalorder %s61, %s62
      %p71 = scmp.eq.s32.totalorder %s16, 0
      %p72 = por %p70, %p71
      %p73 = scmp.ne.s32.totalorder %s61, %s62
      %p74 = scmp.eq.s32.totalorder %s17, 1
      %p75 = por %p73, %p74
      %p77 = scmp.ne.s32.totalorder %s62, %s76
      %p78 = scmp.eq.s32.totalorder %s17, 0
      %p79 = por %p77, %p78
      %s80 = sadd.s32 %s18, %s19
      %s81 = sadd.s32 %s30, %s26
      %s82 = ssub.s32 %s80, %s81
      %p83 = scmp.eq.s32.totalorder %s82, 0
      %s85 = sadd.s32 %s84, 1
      %s86 = scalar_select %p83, %s84, %s85
      %p89 = pneg %p83
      %p90 = scmp.eq.s32.totalorder %s11, 1
      %p91 = por %p89, %p90
      %p92 = scmp.ne.s32.totalorder %s84, %s87
      %p93 = scmp.eq.s32.totalorder %s11, 0
      %p94 = por %p92, %p93
      %p95 = scmp.ne.s32.totalorder %s84, %s87
      %p96 = scmp.eq.s32.totalorder %s16, 1
      %p97 = por %p95, %p96
      %p98 = scmp.ne.s32.totalorder %s87, %s88
      %p99 = scmp.eq.s32.totalorder %s16, 0
      %p100 = por %p98, %p99
      %p101 = scmp.ne.s32.totalorder %s87, %s88
      %p102 = scmp.eq.s32.totalorder %s17, 1
      %p103 = por %p101, %p102
      %p105 = scmp.ne.s32.totalorder %s88, %s104
      %p106 = scmp.eq.s32.totalorder %s17, 0
      %p107 = por %p105, %p106
      %s108 = ssub.s32 %s18, %s30
      %p109 = scmp.eq.s32.totalorder %s108, 0
      %s111 = sadd.s32 %s110, 1
      %s112 = scalar_select %p109, %s110, %s111
      %p115 = pneg %p109
      %p116 = scmp.eq.s32.totalorder %s11, 1
      %p117 = por %p115, %p116
      %p118 = scmp.ne.s32.totalorder %s110, %s113
      %p119 = scmp.eq.s32.totalorder %s11, 0
      %p120 = por %p118, %p119
      %p121 = scmp.ne.s32.totalorder %s110, %s113
      %p122 = scmp.eq.s32.totalorder %s16, 1
      %p123 = por %p121, %p122
      %p124 = scmp.ne.s32.totalorder %s113, %s114
      %p125 = scmp.eq.s32.totalorder %s16, 0
      %p126 = por %p124, %p125
      %p127 = scmp.ne.s32.totalorder %s113, %s114
      %p128 = scmp.eq.s32.totalorder %s17, 1
      %p129 = por %p127, %p128
      %p131 = scmp.ne.s32.totalorder %s114, %s130
      %p132 = scmp.eq.s32.totalorder %s17, 0
      %p133 = por %p131, %p132
      %s134 = ssub.s32 %s18, %s30
      %p135 = scmp.eq.s32.totalorder %s134, 0
      %s137 = sadd.s32 %s136, 1
      %s138 = scalar_select %p135, %s136, %s137
      %p141 = pneg %p135
      %p142 = scmp.eq.s32.totalorder %s11, 1
      %p143 = por %p141, %p142
      %p144 = scmp.ne.s32.totalorder %s136, %s139
      %p145 = scmp.eq.s32.totalorder %s11, 0
      %p146 = por %p144, %p145
      %p147 = scmp.ne.s32.totalorder %s136, %s139
      %p148 = scmp.eq.s32.totalorder %s16, 1
      %p149 = por %p147, %p148
      %p150 = scmp.ne.s32.totalorder %s139, %s140
      %p151 = scmp.eq.s32.totalorder %s16, 0
      %p152 = por %p150, %p151
      %p153 = scmp.ne.s32.totalorder %s139, %s140
      %p154 = scmp.eq.s32.totalorder %s17, 1
      %p155 = por %p153, %p154
      %p157 = scmp.ne.s32.totalorder %s140, %s156
      %p158 = scmp.eq.s32.totalorder %s17, 0
      %p159 = por %p157, %p158
      %p160 = scmp.le.s32.totalorder 1, %s11
      %p161 = scmp.lt.s32.totalorder %s11, 3
      %p162 = pnand %p160, %p161
      %p163 = pneg %p162
      // Predicated region
      $region9: #{deconv2d_bn_forward.1} parent=5 // pred_check
        _
      $region10: #{deconv2d_bn_forward.1} parent=5 // pred_check_branch
        %165 = sbr.rel (%p162) target = $region12
      $region11: #{deconv2d_bn_forward.1} parent=5 // pred_region
        %s166 = ssub.s32 %s11, 1
        // Predicated region
        $region13: #{deconv2d_bn_forward.1} parent=11 // pred_check
          %p167 = pneg %p72
        $region14: #{deconv2d_bn_forward.1} parent=11 // pred_check_branch
          %169 = sbr.rel (%p167) target = $region16
        $region15: #{deconv2d_bn_forward.1} parent=11 // pred_region
          _
        $region16: #{deconv2d_bn_forward.1} parent=11 // pred_fallthru
          _
      $region12: #{deconv2d_bn_forward.1} parent=5 // pred_fallthru
        _
      %p170 = scmp.lt.s32.totalorder %s11, 2
      // Predicated region
      $region17: #{deconv2d_bn_forward.1} parent=5 // pred_check
        %p171 = pneg %p170
      $region18: #{deconv2d_bn_forward.1} parent=5 // pred_check_branch
        %173 = sbr.rel (%p171) target = $region20
      $region19: #{deconv2d_bn_forward.1} parent=5 // pred_region
        // Predicated region
        $region21: #{deconv2d_bn_forward.1} parent=19 // pred_check
          %p174 = pneg %p45
        $region22: #{deconv2d_bn_forward.1} parent=19 // pred_check_branch
          %176 = sbr.rel (%p174) target = $region24
        $region23: #{deconv2d_bn_forward.1} parent=19 // pred_region
          %s177 = sand.u32 %s35, 1
          %s178 = sand.u32 %s35, 1
          %s179 = smul.addr %s178, 40
          %s180 = scalar_lea.vmem [#allocation2], %s179
          %s181 = sadd.s32 %s18, %s19
          %s182 = smul.u32 2, %s181
          %s183 = smul.addr %s182, 4
          %s184 = scalar_lea.vmem %s0, %s183
          // Predicated region
          $region25: #{deconv2d_bn_forward.1} parent=23 // pred_check
            _
          $region26: #{deconv2d_bn_forward.1} parent=23 // pred_check_branch
            %186 = sbr.rel (0) target = $region28
          $region27: #{deconv2d_bn_forward.1} parent=23 // pred_region
            // Predicated region
            $region29: #{deconv2d_bn_forward.1} parent=27 // pred_check
              _
            $region30: #{deconv2d_bn_forward.1} parent=27 // pred_check_branch
              %188 = sbr.rel (0) target = $region32
            $region31: #{deconv2d_bn_forward.1} parent=27 // pred_region
              // Predicated region
              $region44: #{deconv2d_bn_forward.1} parent=31 // pred_check
                _
              $region45: #{deconv2d_bn_forward.1} parent=31 // pred_check_branch
                %211 = sbr.rel (0) target = $region47
              $region46: #{deconv2d_bn_forward.1} parent=31 // pred_region
                loop: start=0, step=1, limit=1
                $region48: #{deconv2d_bn_forward.1} parent=46 // loop_pre_header
                  _
                $region49: #{deconv2d_bn_forward.1} parent=46 // loop_header
                  %s213 = sphi 0, %s217
                  %p214 = scmp.ge.s32.totalorder %s213, 1
                  %s218 = sphi %s184, %s184
                  %s219 = sphi %s180, %s180
                $region50: #{deconv2d_bn_forward.1} parent=46 // loop_header_branch
                  %216 = sbr.rel (%p214) target = $region54
                $region51: #{deconv2d_bn_forward.1} parent=46 // loop_body
                  %v220 = vld [vmem:[%s218] sm:$0xff]
                  %221 = vst [vmem:[%s219] sm:$0xff] %v220
                  %v222 = vld [vmem:[%s218 + $0x10] sm:$0xff]
                  %223 = vst [vmem:[%s219 + $0x8] sm:$0xff] %v222
                  %v224 = vld [vmem:[%s218 + $0x20] sm:$0xff]
                  %225 = vst [vmem:[%s219 + $0x10] sm:$0xff] %v224
                  %v226 = vld [vmem:[%s218 + $0x30] sm:$0xff]
                  %227 = vst [vmem:[%s219 + $0x18] sm:$0xff] %v226
                  %v228 = vld [vmem:[%s218 + $0x40] sm:$0xff]
                  %229 = vst [vmem:[%s219 + $0x20] sm:$0xff] %v228
                $region52: #{deconv2d_bn_forward.1} parent=46 // loop_footer
                  %s217 = sadd.s32 1, %s213
                $region53: #{deconv2d_bn_forward.1} parent=46 // loop_footer_branch
                  %212 = sbr.rel target = $region49
                $region54: #{deconv2d_bn_forward.1} parent=46 // loop_exit
                  _
              $region47: #{deconv2d_bn_forward.1} parent=31 // pred_fallthru
                _
              // Predicated region
              $region55: #{deconv2d_bn_forward.1} parent=31 // pred_check
                _
              $region56: #{deconv2d_bn_forward.1} parent=31 // pred_check_branch
                %231 = sbr.rel target = $region58
              $region57: #{deconv2d_bn_forward.1} parent=31 // pred_region
                _
              $region58: #{deconv2d_bn_forward.1} parent=31 // pred_fallthru
                _
            $region32: #{deconv2d_bn_forward.1} parent=27 // pred_fallthru
              _
            // Predicated region
            $region33: #{deconv2d_bn_forward.1} parent=27 // pred_check
              _
            $region34: #{deconv2d_bn_forward.1} parent=27 // pred_check_branch
              %190 = sbr.rel target = $region36
            $region35: #{deconv2d_bn_forward.1} parent=27 // pred_region
              loop: start=0, step=1, limit=1
              $region37: #{deconv2d_bn_forward.1} parent=35 // loop_pre_header
                _
              $region38: #{deconv2d_bn_forward.1} parent=35 // loop_header
                %s193 = sphi 0, %s197
                %p194 = scmp.ge.s32.totalorder %s193, 1
                %s198 = sphi %s184, %s184
                %s199 = sphi %s180, %s180
              $region39: #{deconv2d_bn_forward.1} parent=35 // loop_header_branch
                %196 = sbr.rel (%p194) target = $region43
              $region40: #{deconv2d_bn_forward.1} parent=35 // loop_body
                %v200 = vld [vmem:[%s198] sm:$0xff]
                %201 = vst [vmem:[%s199] sm:$0xff] %v200
                %v202 = vld [vmem:[%s198 + $0x10] sm:$0xff]
                %203 = vst [vmem:[%s199 + $0x8] sm:$0xff] %v202
                %v204 = vld [vmem:[%s198 + $0x20] sm:$0xff]
                %205 = vst [vmem:[%s199 + $0x10] sm:$0xff] %v204
                %v206 = vld [vmem:[%s198 + $0x30] sm:$0xff]
                %207 = vst [vmem:[%s199 + $0x18] sm:$0xff] %v206
                %v208 = vld [vmem:[%s198 + $0x40] sm:$0xff]
                %209 = vst [vmem:[%s199 + $0x20] sm:$0xff] %v208
              $region41: #{deconv2d_bn_forward.1} parent=35 // loop_footer
                %s197 = sadd.s32 1, %s193
              $region42: #{deconv2d_bn_forward.1} parent=35 // loop_footer_branch
                %192 = sbr.rel target = $region38
              $region43: #{deconv2d_bn_forward.1} parent=35 // loop_exit
                _
            $region36: #{deconv2d_bn_forward.1} parent=27 // pred_fallthru
              _
          $region28: #{deconv2d_bn_forward.1} parent=23 // pred_fallthru
            _
          %232 = vnop
        $region24: #{deconv2d_bn_forward.1} parent=19 // pred_fallthru
          _
      $region20: #{deconv2d_bn_forward.1} parent=5 // pred_fallthru
        _
      %p233 = scmp.le.s32.totalorder 1, %s11
      %p234 = scmp.lt.s32.totalorder %s11, 3
      %p235 = pnand %p233, %p234
      %p236 = pneg %p235
      // Predicated region
      $region59: #{deconv2d_bn_forward.1} parent=5 // pred_check
        _
      $region60: #{deconv2d_bn_forward.1} parent=5 // pred_check_branch
        %238 = sbr.rel (%p235) target = $region62
      $region61: #{deconv2d_bn_forward.1} parent=5 // pred_region
        %s239 = ssub.s32 %s11, 1
        %s240 = sand.u32 %s38, 1
        %s241 = sand.u32 %s38, 1
        %s242 = smul.addr %s241, 40
        %s243 = scalar_lea.vmem [#allocation2], %s242
        // Predicated region
        $region63: #{deconv2d_bn_forward.1} parent=61 // pred_check
          %p244 = pneg %p51
        $region64: #{deconv2d_bn_forward.1} parent=61 // pred_check_branch
          %246 = sbr.rel (%p244) target = $region66
        $region65: #{deconv2d_bn_forward.1} parent=61 // pred_region
          _
        $region66: #{deconv2d_bn_forward.1} parent=61 // pred_fallthru
          _
        %s247 = sand.u32 %s38, 1
        %s248 = sand.u32 %s38, 1
        %s249 = smul.addr %s248, 40
        %s250 = scalar_lea.vmem [#allocation2], %s249
        %p251 = pneg %p51
        %p252 = pneg %p48
        %p253 = pneg %p72
        %p254 = pneg %p69
        %p255 = pneg %p100
        %p256 = pneg %p97
        %s257 = sand.u32 %s87, 1
        %s258 = sand.u32 %s87, 1
        %s259 = smul.addr %s258, 32
        %s260 = scalar_lea.vmem [#allocation3], %s259
        %p261 = pneg %p126
        %p262 = pneg %p123
        %p263 = scmp.lt.s32.totalorder %s20, 1
        %s264 = scalar_select %p263, %s20, 1
        %s265 = smul.addr %s264, 4
        %s266 = smul.addr %s265, 8
        %s267 = scalar_lea.vmem %s3, %s266
        %p268 = pneg %p152
        %p269 = pneg %p149
        %p270 = scmp.lt.s32.totalorder %s20, 1
        %s271 = scalar_select %p270, %s20, 1
        %s272 = smul.addr %s271, 4
        %s273 = smul.addr %s272, 8
        %s274 = scalar_lea.vmem %s4, %s273
        %s275 = sadd.s32 %s20, %s21
        %s276 = smul.u32 2, %s275
        %s277 = sadd.s32 %s20, %s21
        %s278 = smul.u32 2, %s277
        %p279 = scmp.lt.s32.totalorder %s20, 1
        %s280 = scalar_select %p279, %s20, 1
        %s281 = smul.addr %s280, 4
        %s282 = smul.addr %s281, 8
        %s283 = scalar_lea.vmem %s3, %s282
        %p284 = scmp.lt.s32.totalorder %s20, 1
        %s285 = scalar_select %p284, %s20, 1
        %s286 = smul.addr %s285, 4
        %s287 = smul.addr %s286, 8
        %s288 = scalar_lea.vmem %s4, %s287
        %v290 = vld [vmem:[%s1] sm:$0xf]
        %v291 = vld [vmem:[%s1 + $0x4] sm:$0xf]
        %v292 = vld [vmem:[%s1 + $0x8] sm:$0xf]
        %v293 = vld [vmem:[%s1 + $0xc] sm:$0xf]
        %v294 = vld [vmem:[%s243] sm:$0xff]
        %v295 = vld [vmem:[%s243 + $0x8] sm:$0xff]
        %v296 = vld [vmem:[%s243 + $0x10] sm:$0xff]
        %v297 = vld [vmem:[%s243 + $0x18] sm:$0xff]
        %v298 = vld [vmem:[%s243 + $0x20] sm:$0x33]
        %v303 = vunpack.c.l.b16 %v290
        %v304 = vunpack.c.l.b16 %v291
        %v305 = vunpack.c.l.b16 %v292
        %v306 = vunpack.c.l.b16 %v293
        %v307 = vpack.c.b16 %v304, %v303
        %v308 = vpack.c.b16 %v306, %v305
        %v314 = vunpack.c.l.b16 %v294
        %v315 = vunpack.c.h.b16 %v294
        %v316 = vunpack.c.l.b16 %v295
        %v317 = vunpack.c.h.b16 %v295
        %v318 = vunpack.c.l.b16 %v296
        %v319 = vunpack.c.h.b16 %v296
        %v320 = vunpack.c.l.b16 %v297
        %v321 = vunpack.c.h.b16 %v297
        %v322 = vunpack.c.l.b16 %v298
        %v323 = vunpack.c.h.b16 %v298
        %v324 = vpack.c.b16 %v316, %v314
        %v325 = vpack.c.b16 %v317, %v315
        %v326 = vpack.c.b16 %v320, %v318
        %v327 = vpack.c.b16 %v321, %v319
        %v328 = vpack.c.b16 %v322, %v322
        %v329 = vpack.c.b16 %v323, %v323
        %vm334 = vcmask 293888
        %v336 = vsel %vm334, %v307, 0
        %v339 = vsel %vm334, %v308, 0
        %vm341 = vcmask 1041408
        %v343 = vsel %vm341, %v328, 0
        %v346 = vsel %vm341, %v329, 0
        %348 = vmatprep.subr.bf16.mxu0 %v325
        %349 = vmatpush1.bf16.msra.mxu0 %v324
        %350 = vmatprep.subr.bf16.mxu0 %v327
        %351 = vmatpush1.bf16.msra.mxu0 %v326
        %352 = vmatprep.subr.bf16.mxu0 %v346
        %353 = vmatpush1.bf16.msra.mxu0 %v343
        %354 = vmatprep.subr.bf16.mxu0 0
        %355 = vmatpush1.bf16.msra.mxu0 0
        %356 = vmatprep.subr.bf16.mxu0 0
        %357 = vmatpush1.bf16.msra.mxu0 0
        %358 = vmatprep.subr.bf16.mxu0 0
        %359 = vmatpush1.bf16.msra.mxu0 0
        %360 = vmatprep.subr.bf16.mxu0 0
        %361 = vmatpush1.bf16.msra.mxu0 0
        %362 = vmatprep.subr.bf16.mxu0 0
        %363 = vmatpush1.bf16.msra.mxu0 0
        %364 = vmatprep.subr.bf16.mxu0 0
        %365 = vmatpush1.bf16.msra.mxu0 0
        %366 = vmatprep.subr.bf16.mxu0 0
        %367 = vmatpush1.bf16.msra.mxu0 0
        %368 = vmatprep.subr.bf16.mxu0 0
        %369 = vmatpush1.bf16.msra.mxu0 0
        %370 = vmatprep.subr.bf16.mxu0 0
        %371 = vmatpush1.bf16.msra.mxu0 0
        %372 = vmatprep.subr.bf16.mxu0 0
        %373 = vmatpush1.bf16.msra.mxu0 0
        %374 = vmatprep.subr.bf16.mxu0 0
        %375 = vmatpush1.bf16.msra.mxu0 0
        %376 = vmatprep.subr.bf16.mxu0 0
        %377 = vmatpush1.bf16.msra.mxu0 0
        %378 = vmatprep.subr.bf16.mxu0 0
        %379 = vmatpush1.bf16.msra.mxu0 0
        %380 = vmatprep.mubr.bf16.mxu0 0
        %381 = vmatmul.mubr.bf16.gmra.mrb[0].mxu0 %v336
        %v382 = vpop.f32.mrb[0].mxu0
        %v383 = vadd.f32 0.0, %v382
        %v384 = vpop.f32.mrb[0].mxu0
        %v385 = vadd.f32 0.0, %v384
        %v386 = vpop.f32.mrb[0].mxu0
        %v387 = vadd.f32 0.0, %v386
        %v388 = vpop.f32.mrb[0].mxu0
        %v389 = vadd.f32 0.0, %v388
        %390 = vmatprep.mubr.bf16.mxu0 0
        %391 = vmatmul.mubr.bf16.gmra.mrb[0].mxu0 %v339
        %v392 = vpop.f32.mrb[0].mxu0
        %v393 = vadd.f32 0.0, %v392
        %v394 = vpop.f32.mrb[0].mxu0
        %v395 = vadd.f32 0.0, %v394
        %v396 = vpop.f32.mrb[0].mxu0
        %v397 = vadd.f32 0.0, %v396
        %v398 = vpop.f32.mrb[0].mxu0
        %v399 = vadd.f32 0.0, %v398
        %400 = vdwg.mxu0
        %v401 = vpack.c.bf16 %v387, %v383
        %v402 = vpack.c.bf16 %v389, %v385
        %v403 = vpack.c.bf16 %v397, %v393
        %v404 = vpack.c.bf16 %v399, %v395
        %v409 = vunpack.c.l.b16 %v401
        %v410 = vunpack.c.l.b16 %v402
        %v411 = vunpack.c.h.b16 %v401
        %v412 = vunpack.c.h.b16 %v402
        %v413 = vunpack.c.l.b16 %v403
        %v414 = vunpack.c.l.b16 %v404
        %v415 = vunpack.c.h.b16 %v403
        %v416 = vunpack.c.h.b16 %v404
        %v417 = vpack.c.b16 %v410, %v409
        %v418 = vpack.c.b16 %v412, %v411
        %v419 = vpack.c.b16 %v414, %v413
        %v420 = vpack.c.b16 %v416, %v415
        %425 = vst [vmem:[%s260] sm:$0xff] %v417
        %426 = vst [vmem:[%s260 + $0x8] sm:$0xff] %v418
        %427 = vst [vmem:[%s260 + $0x10] sm:$0xff] %v419
        %428 = vst [vmem:[%s260 + $0x18] sm:$0xff] %v420
        %p429 = scmp.eq.s32.totalorder %s21, 0
        // Predicated region
        $region67: #{deconv2d_bn_forward.1} parent=61 // pred_check
          %p430 = pneg %p429
        $region68: #{deconv2d_bn_forward.1} parent=61 // pred_check_branch
          %432 = sbr.rel (%p430) target = $region70
        $region69: #{deconv2d_bn_forward.1} parent=61 // pred_region
          %vm433 = vcmask 7168
          %434 = vst.msk [vmem:[%s283] sm:$0xff] %vm433, 0.0
          %435 = vst.msk [vmem:[%s283 + $0x8] sm:$0xff] %vm433, 0.0
          %436 = vst.msk [vmem:[%s283 + $0x10] sm:$0xff] %vm433, 0.0
          %437 = vst.msk [vmem:[%s283 + $0x18] sm:$0xff] %vm433, 0.0
          %438 = vst.msk [vmem:[%s288] sm:$0xff] %vm433, 0.0
          %439 = vst.msk [vmem:[%s288 + $0x8] sm:$0xff] %vm433, 0.0
          %440 = vst.msk [vmem:[%s288 + $0x10] sm:$0xff] %vm433, 0.0
          %441 = vst.msk [vmem:[%s288 + $0x18] sm:$0xff] %vm433, 0.0
        $region70: #{deconv2d_bn_forward.1} parent=61 // pred_fallthru
          _
        %v442 = vld [vmem:[%s283] sm:$0xff]
        %v443 = vld [vmem:[%s283 + $0x8] sm:$0xff]
        %v444 = vld [vmem:[%s283 + $0x10] sm:$0xff]
        %v445 = vld [vmem:[%s283 + $0x18] sm:$0xff]
        %v446 = vadd.f32 %v383, %v385
        %447 = vadd.xlane.f32.xlu0 %v446
        %v448 = vpop.xlane.xlu0 %447
        %v449 = vadd.f32 %v387, %v389
        %450 = vadd.xlane.f32.xlu0 %v449
        %v451 = vpop.xlane.xlu0 %450
        %v452 = vadd.f32 %v393, %v395
        %453 = vadd.xlane.f32.xlu0 %v452
        %v454 = vpop.xlane.xlu0 %453
        %v455 = vadd.f32 %v397, %v399
        %456 = vadd.xlane.f32.xlu0 %v455
        %v457 = vpop.xlane.xlu0 %456
        %v458 = vadd.f32 %v442, %v448
        %v459 = vadd.f32 %v443, %v451
        %v460 = vadd.f32 %v444, %v454
        %v461 = vadd.f32 %v445, %v457
        %vm462 = vcmask 7168
        %463 = vst.msk [vmem:[%s283] sm:$0xff] %vm462, %v458
        %464 = vst.msk [vmem:[%s283 + $0x8] sm:$0xff] %vm462, %v459
        %465 = vst.msk [vmem:[%s283 + $0x10] sm:$0xff] %vm462, %v460
        %466 = vst.msk [vmem:[%s283 + $0x18] sm:$0xff] %vm462, %v461
        %v467 = vld [vmem:[%s288] sm:$0xff]
        %v468 = vld [vmem:[%s288 + $0x8] sm:$0xff]
        %v469 = vld [vmem:[%s288 + $0x10] sm:$0xff]
        %v470 = vld [vmem:[%s288 + $0x18] sm:$0xff]
        %v471 = vmul.f32 %v383, %v383
        %v472 = vmul.f32 %v385, %v385
        %v473 = vmul.f32 %v387, %v387
        %v474 = vmul.f32 %v389, %v389
        %v475 = vmul.f32 %v393, %v393
        %v476 = vmul.f32 %v395, %v395
        %v477 = vmul.f32 %v397, %v397
        %v478 = vmul.f32 %v399, %v399
        %v479 = vadd.f32 %v471, %v472
        %480 = vadd.xlane.f32.xlu0 %v479
        %v481 = vpop.xlane.xlu0 %480
        %v482 = vadd.f32 %v473, %v474
        %483 = vadd.xlane.f32.xlu0 %v482
        %v484 = vpop.xlane.xlu0 %483
        %v485 = vadd.f32 %v475, %v476
        %486 = vadd.xlane.f32.xlu0 %v485
        %v487 = vpop.xlane.xlu0 %486
        %v488 = vadd.f32 %v477, %v478
        %489 = vadd.xlane.f32.xlu0 %v488
        %v490 = vpop.xlane.xlu0 %489
        %v491 = vadd.f32 %v467, %v481
        %v492 = vadd.f32 %v468, %v484
        %v493 = vadd.f32 %v469, %v487
        %v494 = vadd.f32 %v470, %v490
        %495 = vst.msk [vmem:[%s288] sm:$0xff] %vm462, %v491
        %496 = vst.msk [vmem:[%s288 + $0x8] sm:$0xff] %vm462, %v492
        %497 = vst.msk [vmem:[%s288 + $0x10] sm:$0xff] %vm462, %v493
        %498 = vst.msk [vmem:[%s288 + $0x18] sm:$0xff] %vm462, %v494
        %s499 = sand.u32 %s87, 1
        %s500 = sand.u32 %s87, 1
        %s501 = smul.addr %s500, 32
        %s502 = scalar_lea.vmem [#allocation3], %s501
        %p503 = scmp.lt.s32.totalorder %s20, 1
        %s504 = scalar_select %p503, %s20, 1
        %s505 = smul.addr %s504, 4
        %s506 = smul.addr %s505, 8
        %s507 = scalar_lea.vmem %s3, %s506
        %p508 = scmp.lt.s32.totalorder %s20, 1
        %s509 = scalar_select %p508, %s20, 1
        %s510 = smul.addr %s509, 4
        %s511 = smul.addr %s510, 8
        %s512 = scalar_lea.vmem %s4, %s511
        // Predicated region
        $region71: #{deconv2d_bn_forward.1} parent=61 // pred_check
          %p513 = pneg %p97
        $region72: #{deconv2d_bn_forward.1} parent=61 // pred_check_branch
          %515 = sbr.rel (%p513) target = $region74
        $region73: #{deconv2d_bn_forward.1} parent=61 // pred_region
          %s516 = sadd.s32 %s20, %s21
          %s517 = smul.u32 2, %s516
          %s518 = smul.addr %s517, 4
          %s519 = scalar_lea.vmem %s2, %s518
          // Predicated region
          $region75: #{deconv2d_bn_forward.1} parent=73 // pred_check
            _
          $region76: #{deconv2d_bn_forward.1} parent=73 // pred_check_branch
            %521 = sbr.rel (0) target = $region78
          $region77: #{deconv2d_bn_forward.1} parent=73 // pred_region
            // Predicated region
            $region79: #{deconv2d_bn_forward.1} parent=77 // pred_check
              _
            $region80: #{deconv2d_bn_forward.1} parent=77 // pred_check_branch
              %523 = sbr.rel (0) target = $region82
            $region81: #{deconv2d_bn_forward.1} parent=77 // pred_region
              // Predicated region
              $region94: #{deconv2d_bn_forward.1} parent=81 // pred_check
                _
              $region95: #{deconv2d_bn_forward.1} parent=81 // pred_check_branch
                %544 = sbr.rel (0) target = $region97
              $region96: #{deconv2d_bn_forward.1} parent=81 // pred_region
                loop: start=0, step=1, limit=1
                $region98: #{deconv2d_bn_forward.1} parent=96 // loop_pre_header
                  _
                $region99: #{deconv2d_bn_forward.1} parent=96 // loop_header
                  %s546 = sphi 0, %s550
                  %p547 = scmp.ge.s32.totalorder %s546, 1
                  %s551 = sphi %s502, %s502
                  %s552 = sphi %s519, %s519
                $region100: #{deconv2d_bn_forward.1} parent=96 // loop_header_branch
                  %549 = sbr.rel (%p547) target = $region104
                $region101: #{deconv2d_bn_forward.1} parent=96 // loop_body
                  %v553 = vld [vmem:[%s551] sm:$0xff]
                  %554 = vst [vmem:[%s552] sm:$0xff] %v553
                  %v555 = vld [vmem:[%s551 + $0x8] sm:$0xff]
                  %556 = vst [vmem:[%s552 + $0x10] sm:$0xff] %v555
                  %v557 = vld [vmem:[%s551 + $0x10] sm:$0xff]
                  %558 = vst [vmem:[%s552 + $0x20] sm:$0xff] %v557
                  %v559 = vld [vmem:[%s551 + $0x18] sm:$0xff]
                  %560 = vst [vmem:[%s552 + $0x30] sm:$0xff] %v559
                $region102: #{deconv2d_bn_forward.1} parent=96 // loop_footer
                  %s550 = sadd.s32 1, %s546
                $region103: #{deconv2d_bn_forward.1} parent=96 // loop_footer_branch
                  %545 = sbr.rel target = $region99
                $region104: #{deconv2d_bn_forward.1} parent=96 // loop_exit
                  _
              $region97: #{deconv2d_bn_forward.1} parent=81 // pred_fallthru
                _
              // Predicated region
              $region105: #{deconv2d_bn_forward.1} parent=81 // pred_check
                _
              $region106: #{deconv2d_bn_forward.1} parent=81 // pred_check_branch
                %562 = sbr.rel target = $region108
              $region107: #{deconv2d_bn_forward.1} parent=81 // pred_region
                _
              $region108: #{deconv2d_bn_forward.1} parent=81 // pred_fallthru
                _
            $region82: #{deconv2d_bn_forward.1} parent=77 // pred_fallthru
              _
            // Predicated region
            $region83: #{deconv2d_bn_forward.1} parent=77 // pred_check
              _
            $region84: #{deconv2d_bn_forward.1} parent=77 // pred_check_branch
              %525 = sbr.rel target = $region86
            $region85: #{deconv2d_bn_forward.1} parent=77 // pred_region
              loop: start=0, step=1, limit=1
              $region87: #{deconv2d_bn_forward.1} parent=85 // loop_pre_header
                _
              $region88: #{deconv2d_bn_forward.1} parent=85 // loop_header
                %s528 = sphi 0, %s532
                %p529 = scmp.ge.s32.totalorder %s528, 1
                %s533 = sphi %s502, %s502
                %s534 = sphi %s519, %s519
              $region89: #{deconv2d_bn_forward.1} parent=85 // loop_header_branch
                %531 = sbr.rel (%p529) target = $region93
              $region90: #{deconv2d_bn_forward.1} parent=85 // loop_body
                %v535 = vld [vmem:[%s533] sm:$0xff]
                %536 = vst [vmem:[%s534] sm:$0xff] %v535
                %v537 = vld [vmem:[%s533 + $0x8] sm:$0xff]
                %538 = vst [vmem:[%s534 + $0x10] sm:$0xff] %v537
                %v539 = vld [vmem:[%s533 + $0x10] sm:$0xff]
                %540 = vst [vmem:[%s534 + $0x20] sm:$0xff] %v539
                %v541 = vld [vmem:[%s533 + $0x18] sm:$0xff]
                %542 = vst [vmem:[%s534 + $0x30] sm:$0xff] %v541
              $region91: #{deconv2d_bn_forward.1} parent=85 // loop_footer
                %s532 = sadd.s32 1, %s528
              $region92: #{deconv2d_bn_forward.1} parent=85 // loop_footer_branch
                %527 = sbr.rel target = $region88
              $region93: #{deconv2d_bn_forward.1} parent=85 // loop_exit
                _
            $region86: #{deconv2d_bn_forward.1} parent=77 // pred_fallthru
              _
          $region78: #{deconv2d_bn_forward.1} parent=73 // pred_fallthru
            _
          %563 = vnop
        $region74: #{deconv2d_bn_forward.1} parent=61 // pred_fallthru
          _
        // Predicated region
        $region109: #{deconv2d_bn_forward.1} parent=61 // pred_check
          %p564 = pneg %p123
        $region110: #{deconv2d_bn_forward.1} parent=61 // pred_check_branch
          %566 = sbr.rel (%p564) target = $region112
        $region111: #{deconv2d_bn_forward.1} parent=61 // pred_region
          _
        $region112: #{deconv2d_bn_forward.1} parent=61 // pred_fallthru
          _
        // Predicated region
        $region113: #{deconv2d_bn_forward.1} parent=61 // pred_check
          %p567 = pneg %p149
        $region114: #{deconv2d_bn_forward.1} parent=61 // pred_check_branch
          %569 = sbr.rel (%p567) target = $region116
        $region115: #{deconv2d_bn_forward.1} parent=61 // pred_region
          _
        $region116: #{deconv2d_bn_forward.1} parent=61 // pred_fallthru
          _
      $region62: #{deconv2d_bn_forward.1} parent=5 // pred_fallthru
        _
      %p570 = scmp.le.s32.totalorder 2, %s11
      // Predicated region
      $region117: #{deconv2d_bn_forward.1} parent=5 // pred_check
        %p571 = pneg %p570
      $region118: #{deconv2d_bn_forward.1} parent=5 // pred_check_branch
        %573 = sbr.rel (%p571) target = $region120
      $region119: #{deconv2d_bn_forward.1} parent=5 // pred_region
        %s574 = ssub.s32 %s11, 2
        // Predicated region
        $region121: #{deconv2d_bn_forward.1} parent=119 // pred_check
          %p575 = pneg %p103
        $region122: #{deconv2d_bn_forward.1} parent=119 // pred_check_branch
          %577 = sbr.rel (%p575) target = $region124
        $region123: #{deconv2d_bn_forward.1} parent=119 // pred_region
          %s578 = sand.u32 %s88, 1
          %s579 = sand.u32 %s88, 1
          %s580 = smul.addr %s579, 32
          %s581 = scalar_lea.vmem [#allocation3], %s580
        $region124: #{deconv2d_bn_forward.1} parent=119 // pred_fallthru
          _
        // Predicated region
        $region125: #{deconv2d_bn_forward.1} parent=119 // pred_check
          %p582 = pneg %p129
        $region126: #{deconv2d_bn_forward.1} parent=119 // pred_check_branch
          %584 = sbr.rel (%p582) target = $region128
        $region127: #{deconv2d_bn_forward.1} parent=119 // pred_region
          %p585 = scmp.lt.s32.totalorder %s22, 1
          %s586 = scalar_select %p585, %s22, 1
          %s587 = smul.addr %s586, 4
          %s588 = smul.addr %s587, 8
          %s589 = scalar_lea.vmem %s3, %s588
        $region128: #{deconv2d_bn_forward.1} parent=119 // pred_fallthru
          _
        // Predicated region
        $region129: #{deconv2d_bn_forward.1} parent=119 // pred_check
          %p590 = pneg %p155
        $region130: #{deconv2d_bn_forward.1} parent=119 // pred_check_branch
          %592 = sbr.rel (%p590) target = $region132
        $region131: #{deconv2d_bn_forward.1} parent=119 // pred_region
          %p593 = scmp.lt.s32.totalorder %s22, 1
          %s594 = scalar_select %p593, %s22, 1
          %s595 = smul.addr %s594, 4
          %s596 = smul.addr %s595, 8
          %s597 = scalar_lea.vmem %s4, %s596
        $region132: #{deconv2d_bn_forward.1} parent=119 // pred_fallthru
          _
      $region120: #{deconv2d_bn_forward.1} parent=5 // pred_fallthru
        _
    $region6: #{deconv2d_bn_forward.1} parent=1 // loop_footer
      %s15 = sadd.s32 1, %s11
    $region7: #{deconv2d_bn_forward.1} parent=1 // loop_footer_branch
      %10 = sbr.rel target = $region3
    $region8: #{deconv2d_bn_forward.1} parent=1 // loop_exit
      _

</llo_original>
